<compile_context>
chip_gen: v5e
topology: v5e:2x2
jax: 0.10.0
libtpu: 0.0.40
codegen_flags: <defaults>
</compile_context>

<pallas_src>
import functools

import numpy as np
import jax
import jax.numpy as jnp
from jax.experimental import pallas as pl
from jax.experimental.pallas import tpu as pltpu


def _round_up(x, m):
    return ((x + m - 1) // m) * m


def _pick_tile(padded_dim, cap):
    """Largest multiple of 128 <= cap that divides padded_dim (a multiple of 128)."""
    t = min(padded_dim, cap)
    while padded_dim % t != 0:
        t -= 128
    return t


def propag_kernel(a_ref, psi_ref, b_ref, hd_ref, x_ref, out_ref, acc_ref):
    # Shapes (float32; leading axis 0/1 = real/imag, axis 0..3 for out):
    #   a_ref  : (2, Mp, tn)   A   = H_B2R tile         (lane axis = N)
    #   psi_ref: (2, 1,  tn)   Psi = RIS phase entries  (lane axis = N)
    #   b_ref  : (2, tn, tp)   B   = H_R2U tile         (lane axis = P)
    #   hd_ref : (2, Mp, tp)   Hd  = direct channel tile
    #   x_ref  : (2, Mp, 1)    x   = input signal
    #   out_ref: (4, Mp, tp)   [Hr, Hi, Yr, Yi]
    #   acc_ref: (2, Mp, tp)   f32 accumulator scratch (persists across k)
    k = pl.program_id(1)

    @pl.when(k == 0)
    def _():
        acc_ref[...] = jnp.zeros_like(acc_ref)

    ar = a_ref[0]                      # (Mp, tn)
    ai = a_ref[1]
    pr = psi_ref[0]                    # (1, tn) -> broadcast over Mp rows
    pi = psi_ref[1]

    # Column-scale A by Psi:  A @ diag(Psi)  (complex), done on the small
    # (Mp, tn) operand instead of the large (tn, tp) one.
    asr = ar * pr - ai * pi
    asi = ar * pi + ai * pr

    br = b_ref[0]                      # (tn, tp)
    bi = b_ref[1]

    # Complex matmul, accumulated over the N (K) grid axis: 4 MXU dots, K=tn.
    acc_ref[0] += (jnp.dot(asr, br, preferred_element_type=jnp.float32)
                   - jnp.dot(asi, bi, preferred_element_type=jnp.float32))
    acc_ref[1] += (jnp.dot(asr, bi, preferred_element_type=jnp.float32)
                   + jnp.dot(asi, br, preferred_element_type=jnp.float32))

    @pl.when(k == pl.num_programs(1) - 1)
    def _():
        hr = acc_ref[0] + hd_ref[0]    # (Mp, tp)
        hi = acc_ref[1] + hd_ref[1]
        xr = x_ref[0]                  # (Mp, 1) -> broadcast over tp lanes
        xi = x_ref[1]
        # Direct slab stores (lane-dense, unmasked since tp % 128 == 0).
        out_ref[0] = hr
        out_ref[1] = hi
        out_ref[2] = hr * xr - hi * xi
        out_ref[3] = hr * xi + hi * xr


def propag_pallas(a3, psi3, b3, hd3, x3, *, tile_n, tile_p):
    _, Mp, Np = a3.shape
    _, _, Pp = b3.shape
    grid = (Pp // tile_p, Np // tile_n)   # P parallel (leading), N reduction (last)
    return pl.pallas_call(
        propag_kernel,
        out_shape=jax.ShapeDtypeStruct((4, Mp, Pp), jnp.float32),
        grid_spec=pltpu.PrefetchScalarGridSpec(
            num_scalar_prefetch=0,
            grid=grid,
            in_specs=[
                pl.BlockSpec((2, Mp, tile_n), lambda pi, ki: (0, 0, ki)),      # A
                pl.BlockSpec((2, 1, tile_n), lambda pi, ki: (0, 0, ki)),       # Psi
                pl.BlockSpec((2, tile_n, tile_p), lambda pi, ki: (0, ki, pi)),  # B
                pl.BlockSpec((2, Mp, tile_p), lambda pi, ki: (0, 0, pi)),      # Hd
                pl.BlockSpec((2, Mp, 1), lambda pi, ki: (0, 0, 0)),            # x
            ],
            out_specs=pl.BlockSpec((4, Mp, tile_p), lambda pi, ki: (0, 0, pi)),
            scratch_shapes=[pltpu.VMEM((2, Mp, tile_p), jnp.float32)],
        ),
        compiler_params=pltpu.CompilerParams(
            dimension_semantics=("parallel", "arbitrary"),
            vmem_limit_bytes=32 * 1024 * 1024,
        ),
    )(a3, psi3, b3, hd3, x3)


def _forward_impl(a3, b3, hd3, psi_real, psi_imag, x,
                  *, M, N, P, Mp, Np, Pp, tile_n, tile_p):
    """Jitted forward: pack dynamic operands, run kernel, unpack per path."""
    f32 = jnp.float32
    psi3 = jnp.zeros((2, 1, Np), f32)
    psi3 = psi3.at[0, 0, :N].set(psi_real.astype(f32))
    psi3 = psi3.at[1, 0, :N].set(psi_imag.astype(f32))
    x3 = jnp.zeros((2, Mp, 1), f32)
    x3 = x3.at[0, :M, 0].set(jnp.real(x).astype(f32))
    x3 = x3.at[1, :M, 0].set(jnp.imag(x).astype(f32))

    out = propag_pallas(a3, psi3, b3, hd3, x3, tile_n=tile_n, tile_p=tile_p)

    Hc = jax.lax.complex(out[0, :M, :P], out[1, :M, :P]).astype(jnp.complex64)
    Yc = jax.lax.complex(out[2, :M, :P], out[3, :M, :P]).astype(jnp.complex64)
    H_pt = jnp.transpose(Hc)           # (P, M) - row-contiguous per-path split
    Y_pt = jnp.transpose(Yc)
    # Per-path lists are built inside jit (fused; no per-path host dispatch).
    Y = tuple(Y_pt[p] for p in range(P))
    CSI = tuple(H_pt[p] for p in range(P))
    return Y, CSI


class PropagNetJAX:
    """JAX/Pallas re-implementation of PropagNet.forward."""

    def __init__(self, env, key, withIRS=True):
        # env[0]: H_B2R (M, N) complex, env[1]: H_R2U (N, P) complex,
        # env[2]: Hd (M, P) complex
        self.H_B2R = jnp.asarray(env[0], dtype=jnp.complex64)
        self.H_R2U = jnp.asarray(env[1], dtype=jnp.complex64)
        self.Hd = jnp.asarray(env[2], dtype=jnp.complex64)
        self.withIRS = withIRS

        M, N = self.H_B2R.shape
        P = self.Hd.shape[1]
        f32 = jnp.float32

        if withIRS:
            # matches: 2 * 3.14 * torch.rand(N)  (deterministic via PRNGKey)
            self.phi = 2.0 * 3.14 * jax.random.uniform(key, (N,), dtype=f32)
            self.psi_real = jnp.cos(self.phi)
            self.psi_imag = jnp.sin(self.phi)
        else:
            self.phi = None
            self.psi_real = jnp.zeros((N,), dtype=f32)
            self.psi_imag = jnp.zeros((N,), dtype=f32)

        # --- TPU-friendly padded shapes (sublanes -> 8, lane axes -> 128) ---
        # NOTE: for tiny P (as in the demo) the 128-lane padding of the path
        # axis is wasteful; the layout targets production P >= 128.
        Mp = _round_up(M, 8)
        Np = _round_up(N, 128)          # K dim lane-aligned for the MXU
        Pp = _round_up(P, 128)
        self._dims = (M, N, P, Mp, Np, Pp)

        # --- Pre-pack the STATIC operands once (never re-packed per call) ---
        A3 = jnp.zeros((2, Mp, Np), f32)
        A3 = A3.at[0, :M, :N].set(jnp.real(self.H_B2R).astype(f32))
        A3 = A3.at[1, :M, :N].set(jnp.imag(self.H_B2R).astype(f32))
        B3 = jnp.zeros((2, Np, Pp), f32)
        B3 = B3.at[0, :N, :P].set(jnp.real(self.H_R2U).astype(f32))
        B3 = B3.at[1, :N, :P].set(jnp.imag(self.H_R2U).astype(f32))
        Hd3 = jnp.zeros((2, Mp, Pp), f32)
        Hd3 = Hd3.at[0, :M, :P].set(jnp.real(self.Hd).astype(f32))
        Hd3 = Hd3.at[1, :M, :P].set(jnp.imag(self.Hd).astype(f32))
        self.A3, self.B3, self.Hd3 = A3, B3, Hd3

        # Tile sizes: multiples of 128 that divide the padded dims; sized so
        # double-buffered per-step VMEM stays well under v7x's 32 MiB scoped.
        tile_p = _pick_tile(Pp, 256)
        tile_n = _pick_tile(Np, 512)

        self._fwd = jax.jit(functools.partial(
            _forward_impl, M=M, N=N, P=P, Mp=Mp, Np=Np, Pp=Pp,
            tile_n=tile_n, tile_p=tile_p))

    def forward(self, x):
        # x: complex64 array of shape (M,)
        if self.withIRS:
            # Derived locally / outside jit (kept as attributes for parity
            # with the PyTorch module; the jitted impl takes them as args).
            self.psi_real = jnp.cos(self.phi)
            self.psi_imag = jnp.sin(self.phi)
        Y, CSI = self._fwd(self.A3, self.B3, self.Hd3,
                           self.psi_real, self.psi_imag, x)
        return list(Y), list(CSI)


def _reference_forward(net, x):
    """Pure-JAX reference mirroring the PyTorch loop."""
    Psi = (net.psi_real + 1j * net.psi_imag).astype(jnp.complex64)
    P = net.Hd.shape[1]
    Y, CSI = [], []
    for p in range(P):
        H = net.H_B2R @ jnp.diag(Psi) @ net.H_R2U[:, p] + net.Hd[:, p]
        Y.append(H * x)
        CSI.append(H)
    return Y, CSI


if __name__ == "__main__":
    M, N, P = 8, 16, 8   # base-station antennas, RIS elements, paths

    key = jax.random.PRNGKey(0)
    k_env, k_phi, k_x = jax.random.split(key, 3)
    ks = jax.random.split(k_env, 6)

    H_B2R = (jax.random.normal(ks[0], (M, N)) +
             1j * jax.random.normal(ks[1], (M, N))).astype(jnp.complex64)
    H_R2U = (jax.random.normal(ks[2], (N, P)) +
             1j * jax.random.normal(ks[3], (N, P))).astype(jnp.complex64)
    Hd = (jax.random.normal(ks[4], (M, P)) +
          1j * jax.random.normal(ks[5], (M, P))).astype(jnp.complex64)
    env = (H_B2R, H_R2U, Hd)

    kx1, kx2 = jax.random.split(k_x)
    x = (jax.random.normal(kx1, (M,)) +
         1j * jax.random.normal(kx2, (M,))).astype(jnp.complex64)

    net = PropagNetJAX(env, k_phi, withIRS=True)

    Y, CSI = net.forward(x)
    jax.block_until_ready(Y)
    jax.block_until_ready(CSI)

    # verify against a pure-JAX reference of the PyTorch semantics
    Y_ref, CSI_ref = _reference_forward(net, x)
    for p in range(P):
        np.testing.assert_allclose(np.asarray(Y[p]), np.asarray(Y_ref[p]),
                                   rtol=1e-4, atol=1e-4)
        np.testing.assert_allclose(np.asarray(CSI[p]), np.asarray(CSI_ref[p]),
                                   rtol=1e-4, atol=1e-4)

    print("KERNEL_OK")
</pallas_src>

<mosaic_0001>
module attributes {stable_mosaic.version = 11 : i64} {
  func.func @propag_kernel(%arg0: i32, %arg1: i32, %arg2: memref<2x8x128xf32, #tpu.memory_space<vmem>>, %arg3: memref<2x1x128xf32, #tpu.memory_space<vmem>>, %arg4: memref<2x128x128xf32, #tpu.memory_space<vmem>>, %arg5: memref<2x8x128xf32, #tpu.memory_space<vmem>>, %arg6: memref<2x8x1xf32, #tpu.memory_space<vmem>>, %arg7: memref<4x8x128xf32, #tpu.memory_space<vmem>>, %arg8: memref<2x8x128xf32, #tpu.memory_space<vmem>>) attributes {dimension_semantics = [#tpu.dimension_semantics<parallel>, #tpu.dimension_semantics<arbitrary>], iteration_bounds = array<i64: 1, 1>, scalar_prefetch = 0 : i64, scratch_operands = 1 : i64, tpu.core_type = #tpu.core_type<tc>, window_params = [{transform_indices = @transform_0, window_bounds = array<i64: 2, 8, 128>}, {transform_indices = @transform_1, window_bounds = array<i64: 2, 1, 128>}, {transform_indices = @transform_2, window_bounds = array<i64: 2, 128, 128>}, {transform_indices = @transform_3, window_bounds = array<i64: 2, 8, 128>}, {pipeline_mode = #tpu.pipeline_mode<synchronous>, transform_indices = @transform_4, window_bounds = array<i64: 2, 8, 1>}, {transform_indices = @transform_5, window_bounds = array<i64: 4, 8, 128>}]} {
    %c0_i32 = arith.constant 0 : i32
    %0 = arith.cmpi eq, %arg1, %c0_i32 : i32
    %1 = arith.extui %0 : i1 to i32
    %c0_i32_0 = arith.constant 0 : i32
    %2 = arith.cmpi ne, %1, %c0_i32_0 : i32
    scf.if %2 {
      %cst_34 = arith.constant 0.000000e+00 : f32
      %46 = vector.broadcast %cst_34 : f32 to vector<2x8x128xf32>
      %c0_35 = arith.constant 0 : index
      %c0_36 = arith.constant 0 : index
      %c0_37 = arith.constant 0 : index
      %47 = vector.load %arg8[%c0_35, %c0_36, %c0_37] : memref<2x8x128xf32, #tpu.memory_space<vmem>>, vector<2x8x128xf32>
      tpu.vector_store %arg8[%c0_35, %c0_36, %c0_37], %46 {strides = array<i32>} : memref<2x8x128xf32, #tpu.memory_space<vmem>>, vector<2x8x128xf32>,
    } else {
    }
    %c0 = arith.constant 0 : index
    %c0_1 = arith.constant 0 : index
    %c0_2 = arith.constant 0 : index
    %3 = vector.load %arg2[%c0, %c0_1, %c0_2] : memref<2x8x128xf32, #tpu.memory_space<vmem>>, vector<1x8x128xf32>
    %4 = vector.shape_cast %3 : vector<1x8x128xf32> to vector<8x128xf32>
    %c1 = arith.constant 1 : index
    %c0_3 = arith.constant 0 : index
    %c0_4 = arith.constant 0 : index
    %5 = vector.load %arg2[%c1, %c0_3, %c0_4] : memref<2x8x128xf32, #tpu.memory_space<vmem>>, vector<1x8x128xf32>
    %6 = vector.shape_cast %5 : vector<1x8x128xf32> to vector<8x128xf32>
    %c0_5 = arith.constant 0 : index
    %c0_6 = arith.constant 0 : index
    %c0_7 = arith.constant 0 : index
    %7 = vector.load %arg3[%c0_5, %c0_6, %c0_7] : memref<2x1x128xf32, #tpu.memory_space<vmem>>, vector<1x1x128xf32>
    %8 = vector.shape_cast %7 : vector<1x1x128xf32> to vector<1x128xf32>
    %c1_8 = arith.constant 1 : index
    %c0_9 = arith.constant 0 : index
    %c0_10 = arith.constant 0 : index
    %9 = vector.load %arg3[%c1_8, %c0_9, %c0_10] : memref<2x1x128xf32, #tpu.memory_space<vmem>>, vector<1x1x128xf32>
    %10 = vector.shape_cast %9 : vector<1x1x128xf32> to vector<1x128xf32>
    %11 = vector.broadcast %8 : vector<1x128xf32> to vector<8x128xf32>
    %12 = arith.mulf %4, %11 : vector<8x128xf32>
    %13 = vector.broadcast %10 : vector<1x128xf32> to vector<8x128xf32>
    %14 = arith.mulf %6, %13 : vector<8x128xf32>
    %15 = arith.subf %12, %14 : vector<8x128xf32>
    %16 = vector.broadcast %10 : vector<1x128xf32> to vector<8x128xf32>
    %17 = arith.mulf %4, %16 : vector<8x128xf32>
    %18 = vector.broadcast %8 : vector<1x128xf32> to vector<8x128xf32>
    %19 = arith.mulf %6, %18 : vector<8x128xf32>
    %20 = arith.addf %17, %19 : vector<8x128xf32>
    %c0_11 = arith.constant 0 : index
    %c0_12 = arith.constant 0 : index
    %c0_13 = arith.constant 0 : index
    %21 = vector.load %arg4[%c0_11, %c0_12, %c0_13] : memref<2x128x128xf32, #tpu.memory_space<vmem>>, vector<1x128x128xf32>
    %22 = vector.shape_cast %21 : vector<1x128x128xf32> to vector<128x128xf32>
    %c1_14 = arith.constant 1 : index
    %c0_15 = arith.constant 0 : index
    %c0_16 = arith.constant 0 : index
    %23 = vector.load %arg4[%c1_14, %c0_15, %c0_16] : memref<2x128x128xf32, #tpu.memory_space<vmem>>, vector<1x128x128xf32>
    %24 = vector.shape_cast %23 : vector<1x128x128xf32> to vector<128x128xf32>
    %c0_17 = arith.constant 0 : index
    %c0_18 = arith.constant 0 : index
    %c0_19 = arith.constant 0 : index
    %25 = vector.load %arg8[%c0_17, %c0_18, %c0_19] : memref<2x8x128xf32, #tpu.memory_space<vmem>>, vector<1x8x128xf32>
    %26 = vector.shape_cast %25 : vector<1x8x128xf32> to vector<8x128xf32>
    %cst = arith.constant dense<0.000000e+00> : vector<8x128xf32>
    %27 = tpu.matmul %15, %22, %cst {dimension_numbers = #tpu.dot_dimension_numbers<[1], [0], [0], [1], [0, 0, 1, 1], [], []>} : vector<8x128xf32>, vector<128x128xf32>, vector<8x128xf32> -> vector<8x128xf32>
    %cst_20 = arith.constant dense<0.000000e+00> : vector<8x128xf32>
    %28 = tpu.matmul %20, %24, %cst_20 {dimension_numbers = #tpu.dot_dimension_numbers<[1], [0], [0], [1], [0, 0, 1, 1], [], []>} : vector<8x128xf32>, vector<128x128xf32>, vector<8x128xf32> -> vector<8x128xf32>
    %29 = arith.subf %27, %28 : vector<8x128xf32>
    %30 = arith.addf %26, %29 : vector<8x128xf32>
    %c0_21 = arith.constant 0 : index
    %c0_22 = arith.constant 0 : index
    %c0_23 = arith.constant 0 : index
    %31 = vector.load %arg8[%c0_21, %c0_22, %c0_23] : memref<2x8x128xf32, #tpu.memory_space<vmem>>, vector<1x8x128xf32>
    %32 = vector.shape_cast %31 : vector<1x8x128xf32> to vector<8x128xf32>
    %33 = vector.shape_cast %30 : vector<8x128xf32> to vector<1x8x128xf32>
    tpu.vector_store %arg8[%c0_21, %c0_22, %c0_23], %33 {strides = array<i32>} : memref<2x8x128xf32, #tpu.memory_space<vmem>>, vector<1x8x128xf32>,
    %c1_24 = arith.constant 1 : index
    %c0_25 = arith.constant 0 : index
    %c0_26 = arith.constant 0 : index
    %34 = vector.load %arg8[%c1_24, %c0_25, %c0_26] : memref<2x8x128xf32, #tpu.memory_space<vmem>>, vector<1x8x128xf32>
    %35 = vector.shape_cast %34 : vector<1x8x128xf32> to vector<8x128xf32>
    %cst_27 = arith.constant dense<0.000000e+00> : vector<8x128xf32>
    %36 = tpu.matmul %15, %24, %cst_27 {dimension_numbers = #tpu.dot_dimension_numbers<[1], [0], [0], [1], [0, 0, 1, 1], [], []>} : vector<8x128xf32>, vector<128x128xf32>, vector<8x128xf32> -> vector<8x128xf32>
    %cst_28 = arith.constant dense<0.000000e+00> : vector<8x128xf32>
    %37 = tpu.matmul %20, %22, %cst_28 {dimension_numbers = #tpu.dot_dimension_numbers<[1], [0], [0], [1], [0, 0, 1, 1], [], []>} : vector<8x128xf32>, vector<128x128xf32>, vector<8x128xf32> -> vector<8x128xf32>
    %38 = arith.addf %36, %37 : vector<8x128xf32>
    %39 = arith.addf %35, %38 : vector<8x128xf32>
    %c1_29 = arith.constant 1 : index
    %c0_30 = arith.constant 0 : index
    %c0_31 = arith.constant 0 : index
    %40 = vector.load %arg8[%c1_29, %c0_30, %c0_31] : memref<2x8x128xf32, #tpu.memory_space<vmem>>, vector<1x8x128xf32>
    %41 = vector.shape_cast %40 : vector<1x8x128xf32> to vector<8x128xf32>
    %42 = vector.shape_cast %39 : vector<8x128xf32> to vector<1x8x128xf32>
    tpu.vector_store %arg8[%c1_29, %c0_30, %c0_31], %42 {strides = array<i32>} : memref<2x8x128xf32, #tpu.memory_space<vmem>>, vector<1x8x128xf32>,
    %c0_i32_32 = arith.constant 0 : i32
    %43 = arith.cmpi eq, %arg1, %c0_i32_32 : i32
    %44 = arith.extui %43 : i1 to i32
    %c0_i32_33 = arith.constant 0 : i32
    %45 = arith.cmpi ne, %44, %c0_i32_33 : i32
    scf.if %45 {
      %c0_34 = arith.constant 0 : index
      %c0_35 = arith.constant 0 : index
      %c0_36 = arith.constant 0 : index
      %46 = vector.load %arg8[%c0_34, %c0_35, %c0_36] : memref<2x8x128xf32, #tpu.memory_space<vmem>>, vector<1x8x128xf32>
      %47 = vector.shape_cast %46 : vector<1x8x128xf32> to vector<8x128xf32>
      %c0_37 = arith.constant 0 : index
      %c0_38 = arith.constant 0 : index
      %c0_39 = arith.constant 0 : index
      %48 = vector.load %arg5[%c0_37, %c0_38, %c0_39] : memref<2x8x128xf32, #tpu.memory_space<vmem>>, vector<1x8x128xf32>
      %49 = vector.shape_cast %48 : vector<1x8x128xf32> to vector<8x128xf32>
      %50 = arith.addf %47, %49 : vector<8x128xf32>
      %c1_40 = arith.constant 1 : index
      %c0_41 = arith.constant 0 : index
      %c0_42 = arith.constant 0 : index
      %51 = vector.load %arg8[%c1_40, %c0_41, %c0_42] : memref<2x8x128xf32, #tpu.memory_space<vmem>>, vector<1x8x128xf32>
      %52 = vector.shape_cast %51 : vector<1x8x128xf32> to vector<8x128xf32>
      %c1_43 = arith.constant 1 : index
      %c0_44 = arith.constant 0 : index
      %c0_45 = arith.constant 0 : index
      %53 = vector.load %arg5[%c1_43, %c0_44, %c0_45] : memref<2x8x128xf32, #tpu.memory_space<vmem>>, vector<1x8x128xf32>
      %54 = vector.shape_cast %53 : vector<1x8x128xf32> to vector<8x128xf32>
      %55 = arith.addf %52, %54 : vector<8x128xf32>
      %c0_46 = arith.constant 0 : index
      %c0_47 = arith.constant 0 : index
      %c0_48 = arith.constant 0 : index
      %56 = vector.load %arg6[%c0_46, %c0_47, %c0_48] : memref<2x8x1xf32, #tpu.memory_space<vmem>>, vector<1x8x1xf32>
      %57 = vector.shape_cast %56 : vector<1x8x1xf32> to vector<8x1xf32>
      %c1_49 = arith.constant 1 : index
      %c0_50 = arith.constant 0 : index
      %c0_51 = arith.constant 0 : index
      %58 = vector.load %arg6[%c1_49, %c0_50, %c0_51] : memref<2x8x1xf32, #tpu.memory_space<vmem>>, vector<1x8x1xf32>
      %59 = vector.shape_cast %58 : vector<1x8x1xf32> to vector<8x1xf32>
      %c0_52 = arith.constant 0 : index
      %c0_53 = arith.constant 0 : index
      %c0_54 = arith.constant 0 : index
      %60 = vector.load %arg7[%c0_52, %c0_53, %c0_54] : memref<4x8x128xf32, #tpu.memory_space<vmem>>, vector<1x8x128xf32>
      %61 = vector.shape_cast %60 : vector<1x8x128xf32> to vector<8x128xf32>
      %62 = vector.shape_cast %50 : vector<8x128xf32> to vector<1x8x128xf32>
      tpu.vector_store %arg7[%c0_52, %c0_53, %c0_54], %62 {strides = array<i32>} : memref<4x8x128xf32, #tpu.memory_space<vmem>>, vector<1x8x128xf32>,
      %c1_55 = arith.constant 1 : index
      %c0_56 = arith.constant 0 : index
      %c0_57 = arith.constant 0 : index
      %63 = vector.load %arg7[%c1_55, %c0_56, %c0_57] : memref<4x8x128xf32, #tpu.memory_space<vmem>>, vector<1x8x128xf32>
      %64 = vector.shape_cast %63 : vector<1x8x128xf32> to vector<8x128xf32>
      %65 = vector.shape_cast %55 : vector<8x128xf32> to vector<1x8x128xf32>
      tpu.vector_store %arg7[%c1_55, %c0_56, %c0_57], %65 {strides = array<i32>} : memref<4x8x128xf32, #tpu.memory_space<vmem>>, vector<1x8x128xf32>,
      %66 = vector.broadcast %57 : vector<8x1xf32> to vector<8x128xf32>
      %67 = arith.mulf %50, %66 : vector<8x128xf32>
      %68 = vector.broadcast %59 : vector<8x1xf32> to vector<8x128xf32>
      %69 = arith.mulf %55, %68 : vector<8x128xf32>
      %70 = arith.subf %67, %69 : vector<8x128xf32>
      %c2 = arith.constant 2 : index
      %c0_58 = arith.constant 0 : index
      %c0_59 = arith.constant 0 : index
      %71 = vector.load %arg7[%c2, %c0_58, %c0_59] : memref<4x8x128xf32, #tpu.memory_space<vmem>>, vector<1x8x128xf32>
      %72 = vector.shape_cast %71 : vector<1x8x128xf32> to vector<8x128xf32>
      %73 = vector.shape_cast %70 : vector<8x128xf32> to vector<1x8x128xf32>
      tpu.vector_store %arg7[%c2, %c0_58, %c0_59], %73 {strides = array<i32>} : memref<4x8x128xf32, #tpu.memory_space<vmem>>, vector<1x8x128xf32>,
      %74 = vector.broadcast %59 : vector<8x1xf32> to vector<8x128xf32>
      %75 = arith.mulf %50, %74 : vector<8x128xf32>
      %76 = vector.broadcast %57 : vector<8x1xf32> to vector<8x128xf32>
      %77 = arith.mulf %55, %76 : vector<8x128xf32>
      %78 = arith.addf %75, %77 : vector<8x128xf32>
      %c3 = arith.constant 3 : index
      %c0_60 = arith.constant 0 : index
      %c0_61 = arith.constant 0 : index
      %79 = vector.load %arg7[%c3, %c0_60, %c0_61] : memref<4x8x128xf32, #tpu.memory_space<vmem>>, vector<1x8x128xf32>
      %80 = vector.shape_cast %79 : vector<1x8x128xf32> to vector<8x128xf32>
      %81 = vector.shape_cast %78 : vector<8x128xf32> to vector<1x8x128xf32>
      tpu.vector_store %arg7[%c3, %c0_60, %c0_61], %81 {strides = array<i32>} : memref<4x8x128xf32, #tpu.memory_space<vmem>>, vector<1x8x128xf32>,
    } else {
    }
    return
  }
  func.func @transform_0(%arg0: i32, %arg1: i32) -> (i32, i32, i32) {
    %c0_i32 = arith.constant 0 : i32
    %c0_i32_0 = arith.constant 0 : i32
    %c0_i32_1 = arith.constant 0 : i32
    return %c0_i32, %c0_i32_0, %arg1 : i32, i32, i32
  }
  func.func @transform_1(%arg0: i32, %arg1: i32) -> (i32, i32, i32) {
    %c0_i32 = arith.constant 0 : i32
    %c0_i32_0 = arith.constant 0 : i32
    %c0_i32_1 = arith.constant 0 : i32
    return %c0_i32, %c0_i32_0, %arg1 : i32, i32, i32
  }
  func.func @transform_2(%arg0: i32, %arg1: i32) -> (i32, i32, i32) {
    %c0_i32 = arith.constant 0 : i32
    %c0_i32_0 = arith.constant 0 : i32
    return %c0_i32, %arg1, %arg0 : i32, i32, i32
  }
  func.func @transform_3(%arg0: i32, %arg1: i32) -> (i32, i32, i32) {
    %c0_i32 = arith.constant 0 : i32
    %c0_i32_0 = arith.constant 0 : i32
    %c0_i32_1 = arith.constant 0 : i32
    return %c0_i32, %c0_i32_0, %arg0 : i32, i32, i32
  }
  func.func @transform_4(%arg0: i32, %arg1: i32) -> (i32, i32, i32) {
    %c0_i32 = arith.constant 0 : i32
    %c0_i32_0 = arith.constant 0 : i32
    %c0_i32_1 = arith.constant 0 : i32
    %c0_i32_2 = arith.constant 0 : i32
    return %c0_i32, %c0_i32_0, %c0_i32_1 : i32, i32, i32
  }
  func.func @transform_5(%arg0: i32, %arg1: i32) -> (i32, i32, i32) {
    %c0_i32 = arith.constant 0 : i32
    %c0_i32_0 = arith.constant 0 : i32
    %c0_i32_1 = arith.constant 0 : i32
    return %c0_i32, %c0_i32_0, %arg0 : i32, i32, i32
  }
}

</mosaic_0001>

<llo_original>
// kernel: custom-call
$region0: #{custom-call}
  %s0 = inlined_call_operand.hbm [shape: c64[8], index: 0, kind: input, shape index: {}]
  %s1 = inlined_call_operand.vmem [shape: f32[8], index: 1, kind: output, shape index: {}]
  $region1: #{custom-call} parent=0
    #allocation0 [shape = 's32[1]{0}', space=sflag, size = 0x4, scoped, tag = 'scoped memory for custom-call']
    %2 = vsyncpa [#allocation0], 0
    %s4 = sshll.u32 %s0, 4
    %s5 = int_to_ptr.hbm [resolvable:$true] %s4
    %s6 = sshll.u32 %s1, 4
    %s7 = int_to_ptr.vmem [resolvable:$true] %s6
    %9 = dma.hbm_to_vmem [thread:$0]  %s5, 16, %s7, [#allocation0]
    %11 = dma.done [#allocation0], 16
    %12 = vsyncpa [#allocation0], 1

// kernel: custom-call.1
$region0: #{custom-call.1}
  %s0 = inlined_call_operand.hbm [shape: c64[8], index: 0, kind: input, shape index: {}]
  %s1 = inlined_call_operand.vmem [shape: f32[8], index: 1, kind: output, shape index: {}]
  %s2 = scalar_lea.hbm %s0, 1
  $region1: #{custom-call.1} parent=0
    #allocation0 [shape = 's32[1]{0}', space=sflag, size = 0x4, scoped, tag = 'scoped memory for custom-call.1']
    %3 = vsyncpa [#allocation0], 0
    %s5 = sshll.u32 %s2, 4
    %s6 = int_to_ptr.hbm [resolvable:$true] %s5
    %s7 = sshll.u32 %s1, 4
    %s8 = int_to_ptr.vmem [resolvable:$true] %s7
    %10 = dma.hbm_to_vmem [thread:$0]  %s6, 16, %s8, [#allocation0]
    %12 = dma.done [#allocation0], 16
    %13 = vsyncpa [#allocation0], 1

// kernel: custom-call.17
$region0: #{custom-call.17}
  %s0 = inlined_call_operand.vmem [shape: f32[8], index: 0, kind: input, shape index: {}]
  %s1 = inlined_call_operand.vmem [shape: f32[8], index: 1, kind: input, shape index: {}]
  %s2 = inlined_call_operand.hbm [shape: c64[8], index: 2, kind: output, shape index: {}]
  %s3 = scalar_lea.hbm %s2, 1
  $region1: #{custom-call.17} parent=0
    #allocation0 [shape = 's32[1]{0}', space=sflag, size = 0x4, scoped, tag = 'scoped memory for custom-call.17']
    %4 = vsyncpa [#allocation0], 0
    %s6 = sshll.u32 %s0, 4
    %s7 = int_to_ptr.vmem [resolvable:$true] %s6
    %s8 = sshll.u32 %s2, 4
    %s9 = int_to_ptr.hbm [resolvable:$true] %s8
    %11 = dma.vmem_to_hbm [thread:$0]  %s7, 16, %s9, [#allocation0]
    %13 = dma.done [#allocation0], 16
    %14 = vsyncpa [#allocation0], 1
  $region2: #{custom-call.17} parent=0
    #allocation1 [shape = 's32[1]{0}', space=sflag, size = 0x4, scoped, tag = 'scoped memory for custom-call.17']
    %15 = vsyncpa [#allocation1], 0
    %s17 = sshll.u32 %s1, 4
    %s18 = int_to_ptr.vmem [resolvable:$true] %s17
    %s19 = sshll.u32 %s3, 4
    %s20 = int_to_ptr.hbm [resolvable:$true] %s19
    %22 = dma.vmem_to_hbm [thread:$0]  %s18, 16, %s20, [#allocation1]
    %24 = dma.done [#allocation1], 16
    %25 = vsyncpa [#allocation1], 1

// kernel: _forward_impl.1
$region0: #{_forward_impl.1}
  #allocation0 [shape = 'u32[]', space=smem, size = 0x4, offset = 0x4, fixed_abs, tag = 'smem constant byte address 0x4 - core index']
  #allocation1 [shape = 'u32[72,128]{1,0:T(1,128)}', space=vmem, size = 0x9000, scoped, tag = 'internal scratch']
  #allocation2 [shape = 'f32[2,8,128]{2,1,0:T(8,128)}', space=vmem, size = 0x2000, scoped, tag = 'scratch operand']
  %s0 = inlined_call_operand.vmem [shape: f32[2,8,128], index: 0, kind: input, shape index: {}]
  %s1 = inlined_call_operand.vmem [shape: f32[2,1,128], index: 1, kind: input, shape index: {}]
  %s2 = inlined_call_operand.hbm [shape: f32[2,128,128], index: 2, kind: input, shape index: {}]
  %s3 = inlined_call_operand.vmem [shape: f32[2,8,128], index: 3, kind: input, shape index: {}]
  %s4 = inlined_call_operand.vmem [shape: f32[2,8,1], index: 4, kind: input, shape index: {}]
  %s5 = inlined_call_operand.vmem [shape: f32[4,8,128], index: 5, kind: output, shape index: {}]
  %s6 = sld [smem:[#allocation0]]
  $region42: #{_forward_impl.1} parent=0
    _
  %s8 = ssub.s32 1, %s6
  %s9 = scalar_select 0, %s8, %s6
  $region1: #{_forward_impl.1} parent=0
    #allocation3 [shape = 'u8[131072]{0}', space=vmem, size = 0x20000, scoped, tag = 'input window, operand 2, single buffered']
    #allocation4 [shape = 's32[1]{0}', space=sflag, size = 0x4, scoped, tag = 'scoped memory for _forward_impl.1']
    %10 = vsyncpa [#allocation4], 0
    // Predicated region
    $region2: #{_forward_impl.1} parent=1 // pred_check
      _
    $region3: #{_forward_impl.1} parent=1 // pred_check_branch
      %12 = sbr.rel (0) target = $region5
    $region4: #{_forward_impl.1} parent=1 // pred_region
      _
    $region5: #{_forward_impl.1} parent=1 // pred_fallthru
      _
    // Predicated region
    $region6: #{_forward_impl.1} parent=1 // pred_check
      _
    $region7: #{_forward_impl.1} parent=1 // pred_check_branch
      %14 = sbr.rel (0) target = $region9
    $region8: #{_forward_impl.1} parent=1 // pred_region
      _
    $region9: #{_forward_impl.1} parent=1 // pred_fallthru
      _
    // Predicated region
    $region10: #{_forward_impl.1} parent=1 // pred_check
      _
    $region11: #{_forward_impl.1} parent=1 // pred_check_branch
      %16 = sbr.rel (0) target = $region13
    $region12: #{_forward_impl.1} parent=1 // pred_region
      %18 = vsyncadd [#allocation4], 0
      %s19 = sshll.u32 %s2, 4
      %s20 = int_to_ptr.hbm [resolvable:$true] %s19
      %s21 = sshll.u32 [#allocation3], 4
      %s22 = int_to_ptr.vmem [resolvable:$true] %s21
      %27 = dma.hbm_to_vmem [thread:$0]  %s20, 4096, %s22, [#allocation4], 128, 128, 8
    $region13: #{_forward_impl.1} parent=1 // pred_fallthru
      _
    // Predicated region
    $region14: #{_forward_impl.1} parent=1 // pred_check
      _
    $region15: #{_forward_impl.1} parent=1 // pred_check_branch
      %29 = sbr.rel (0) target = $region17
    $region16: #{_forward_impl.1} parent=1 // pred_region
      _
    $region17: #{_forward_impl.1} parent=1 // pred_fallthru
      _
    // Predicated region
    $region18: #{_forward_impl.1} parent=1 // pred_check
      _
    $region19: #{_forward_impl.1} parent=1 // pred_check_branch
      %31 = sbr.rel (0) target = $region21
    $region20: #{_forward_impl.1} parent=1 // pred_region
      _
    $region21: #{_forward_impl.1} parent=1 // pred_fallthru
      _
    // Predicated region
    $region22: #{_forward_impl.1} parent=1 // pred_check
      _
    $region23: #{_forward_impl.1} parent=1 // pred_check_branch
      %33 = sbr.rel (0) target = $region25
    $region24: #{_forward_impl.1} parent=1 // pred_region
      %35 = dma.done [#allocation4], 4096
    $region25: #{_forward_impl.1} parent=1 // pred_fallthru
      _
    %p36 = scmp.eq.s32.totalorder 0, 0
    // Predicated region
    $region26: #{_forward_impl.1} parent=1 // pred_check
      %p37 = pneg %p36
    $region27: #{_forward_impl.1} parent=1 // pred_check_branch
      %39 = sbr.rel (%p37) target = $region29
    $region28: #{_forward_impl.1} parent=1 // pred_region
      %40 = vst [vmem:[#allocation2] sm:$0xff] 0.0
      %41 = vst [vmem:[#allocation2 + $0x8] sm:$0xff] 0.0
    $region29: #{_forward_impl.1} parent=1 // pred_fallthru
      _
    %v42 = vld [vmem:[%s0] sm:$0xff]
    %s43 = scalar_lea.vmem %s0, 8
    %v44 = vld [vmem:[%s43] sm:$0xff]
    %v45 = vld [vmem:[%s1] sm:$0x1]
    %s46 = scalar_lea.vmem %s1, 1
    %v47 = vld [vmem:[%s46] sm:$0x1]
    %v49 = vperm.slane %v45, 0
    %v51 = vmul.f32 %v42, %v49
    %v53 = vperm.slane %v47, 0
    %v55 = vmul.f32 %v44, %v53
    %v56 = vsub.f32 %v51, %v55
    %v57 = vmul.f32 %v42, %v53
    %v58 = vmul.f32 %v44, %v49
    %v59 = vadd.f32 %v57, %v58
    %v60 = vld [vmem:[#allocation3] sm:$0xff]
    %v61 = vld [vmem:[#allocation3 + $0x8] sm:$0xff]
    %v62 = vld [vmem:[#allocation3 + $0x10] sm:$0xff]
    %v63 = vld [vmem:[#allocation3 + $0x18] sm:$0xff]
    %v64 = vld [vmem:[#allocation3 + $0x20] sm:$0xff]
    %v65 = vld [vmem:[#allocation3 + $0x28] sm:$0xff]
    %v66 = vld [vmem:[#allocation3 + $0x30] sm:$0xff]
    %v67 = vld [vmem:[#allocation3 + $0x38] sm:$0xff]
    %v68 = vld [vmem:[#allocation3 + $0x40] sm:$0xff]
    %v69 = vld [vmem:[#allocation3 + $0x48] sm:$0xff]
    %v70 = vld [vmem:[#allocation3 + $0x50] sm:$0xff]
    %v71 = vld [vmem:[#allocation3 + $0x58] sm:$0xff]
    %v72 = vld [vmem:[#allocation3 + $0x60] sm:$0xff]
    %v73 = vld [vmem:[#allocation3 + $0x68] sm:$0xff]
    %v74 = vld [vmem:[#allocation3 + $0x70] sm:$0xff]
    %v75 = vld [vmem:[#allocation3 + $0x78] sm:$0xff]
    %s76 = scalar_lea.vmem [#allocation3], 128
    %v77 = vld [vmem:[%s76] sm:$0xff]
    %v78 = vld [vmem:[%s76 + $0x8] sm:$0xff]
    %v79 = vld [vmem:[%s76 + $0x10] sm:$0xff]
    %v80 = vld [vmem:[%s76 + $0x18] sm:$0xff]
    %v81 = vld [vmem:[%s76 + $0x20] sm:$0xff]
    %v82 = vld [vmem:[%s76 + $0x28] sm:$0xff]
    %v83 = vld [vmem:[%s76 + $0x30] sm:$0xff]
    %v84 = vld [vmem:[%s76 + $0x38] sm:$0xff]
    %v85 = vld [vmem:[%s76 + $0x40] sm:$0xff]
    %v86 = vld [vmem:[%s76 + $0x48] sm:$0xff]
    %v87 = vld [vmem:[%s76 + $0x50] sm:$0xff]
    %v88 = vld [vmem:[%s76 + $0x58] sm:$0xff]
    %v89 = vld [vmem:[%s76 + $0x60] sm:$0xff]
    %v90 = vld [vmem:[%s76 + $0x68] sm:$0xff]
    %v91 = vld [vmem:[%s76 + $0x70] sm:$0xff]
    %v92 = vld [vmem:[%s76 + $0x78] sm:$0xff]
    %v93 = vld [vmem:[#allocation2] sm:$0xff]
    %94 = vmatpush.msra.mxu0 %v75
    %95 = vmatpush.msra.mxu0 %v74
    %96 = vmatpush.msra.mxu0 %v73
    %97 = vmatpush.msra.mxu0 %v72
    %98 = vmatpush.msra.mxu0 %v71
    %99 = vmatpush.msra.mxu0 %v70
    %100 = vmatpush.msra.mxu0 %v69
    %101 = vmatpush.msra.mxu0 %v68
    %102 = vmatpush.msra.mxu0 %v67
    %103 = vmatpush.msra.mxu0 %v66
    %104 = vmatpush.msra.mxu0 %v65
    %105 = vmatpush.msra.mxu0 %v64
    %106 = vmatpush.msra.mxu0 %v63
    %107 = vmatpush.msra.mxu0 %v62
    %108 = vmatpush.msra.mxu0 %v61
    %109 = vmatpush.msra.mxu0 %v60
    %110 = vmatmul.f32.gmra.mxu0 %v56
    %v111 = vpop.f32.mrf.mxu0
    %v112 = vadd.f32 0.0, %v111
    %113 = vdwg.mxu0
    %114 = vmatpush.msra.mxu0 %v92
    %115 = vmatpush.msra.mxu0 %v91
    %116 = vmatpush.msra.mxu0 %v90
    %117 = vmatpush.msra.mxu0 %v89
    %118 = vmatpush.msra.mxu0 %v88
    %119 = vmatpush.msra.mxu0 %v87
    %120 = vmatpush.msra.mxu0 %v86
    %121 = vmatpush.msra.mxu0 %v85
    %122 = vmatpush.msra.mxu0 %v84
    %123 = vmatpush.msra.mxu0 %v83
    %124 = vmatpush.msra.mxu0 %v82
    %125 = vmatpush.msra.mxu0 %v81
    %126 = vmatpush.msra.mxu0 %v80
    %127 = vmatpush.msra.mxu0 %v79
    %128 = vmatpush.msra.mxu0 %v78
    %129 = vmatpush.msra.mxu0 %v77
    %130 = vmatmul.f32.gmra.mxu0 %v59
    %v131 = vpop.f32.mrf.mxu0
    %v132 = vadd.f32 0.0, %v131
    %133 = vdwg.mxu0
    %v134 = vsub.f32 %v112, %v132
    %v135 = vadd.f32 %v93, %v134
    %136 = vst [vmem:[#allocation2] sm:$0xff] %v135
    %s137 = scalar_lea.vmem [#allocation2], 8
    %v138 = vld [vmem:[%s137] sm:$0xff]
    %139 = vmatpush.msra.mxu0 %v75
    %140 = vmatpush.msra.mxu0 %v74
    %141 = vmatpush.msra.mxu0 %v73
    %142 = vmatpush.msra.mxu0 %v72
    %143 = vmatpush.msra.mxu0 %v71
    %144 = vmatpush.msra.mxu0 %v70
    %145 = vmatpush.msra.mxu0 %v69
    %146 = vmatpush.msra.mxu0 %v68
    %147 = vmatpush.msra.mxu0 %v67
    %148 = vmatpush.msra.mxu0 %v66
    %149 = vmatpush.msra.mxu0 %v65
    %150 = vmatpush.msra.mxu0 %v64
    %151 = vmatpush.msra.mxu0 %v63
    %152 = vmatpush.msra.mxu0 %v62
    %153 = vmatpush.msra.mxu0 %v61
    %154 = vmatpush.msra.mxu0 %v60
    %155 = vmatmul.f32.gmra.mxu0 %v59
    %v156 = vpop.f32.mrf.mxu0
    %v157 = vadd.f32 0.0, %v156
    %158 = vdwg.mxu0
    %159 = vmatpush.msra.mxu0 %v92
    %160 = vmatpush.msra.mxu0 %v91
    %161 = vmatpush.msra.mxu0 %v90
    %162 = vmatpush.msra.mxu0 %v89
    %163 = vmatpush.msra.mxu0 %v88
    %164 = vmatpush.msra.mxu0 %v87
    %165 = vmatpush.msra.mxu0 %v86
    %166 = vmatpush.msra.mxu0 %v85
    %167 = vmatpush.msra.mxu0 %v84
    %168 = vmatpush.msra.mxu0 %v83
    %169 = vmatpush.msra.mxu0 %v82
    %170 = vmatpush.msra.mxu0 %v81
    %171 = vmatpush.msra.mxu0 %v80
    %172 = vmatpush.msra.mxu0 %v79
    %173 = vmatpush.msra.mxu0 %v78
    %174 = vmatpush.msra.mxu0 %v77
    %175 = vmatmul.f32.gmra.mxu0 %v56
    %v176 = vpop.f32.mrf.mxu0
    %v177 = vadd.f32 %v157, %v176
    %178 = vdwg.mxu0
    %v179 = vadd.f32 %v138, %v177
    %180 = vst [vmem:[%s137] sm:$0xff] %v179
    // Predicated region
    $region30: #{_forward_impl.1} parent=1 // pred_check
      %p181 = pneg %p36
    $region31: #{_forward_impl.1} parent=1 // pred_check_branch
      %183 = sbr.rel (%p181) target = $region33
    $region32: #{_forward_impl.1} parent=1 // pred_region
      %v184 = vld [vmem:[#allocation2] sm:$0xff]
      %v185 = vld [vmem:[%s3] sm:$0xff]
      %v186 = vadd.f32 %v184, %v185
      %v187 = vld [vmem:[%s137] sm:$0xff]
      %s188 = scalar_lea.vmem %s3, 8
      %v189 = vld [vmem:[%s188] sm:$0xff]
      %v190 = vadd.f32 %v187, %v189
      %v191 = vld [vmem:[%s4] sm:$0xff]
      %s192 = scalar_lea.vmem %s4, 8
      %v193 = vld [vmem:[%s192] sm:$0xff]
      %194 = vst [vmem:[%s5] sm:$0xff] %v186
      %s195 = scalar_lea.vmem %s5, 8
      %196 = vst [vmem:[%s195] sm:$0xff] %v190
      %198 = vset.pattern.permute.xlu0 0
      %199 = vperm.xlu0 %198, %v191
      %v200 = vpop.permute.xlu0 %199
      %v202 = vmul.f32 %v186, %v200
      %204 = vset.pattern.permute.xlu0 0
      %205 = vperm.xlu0 %204, %v193
      %v206 = vpop.permute.xlu0 %205
      %v208 = vmul.f32 %v190, %v206
      %v209 = vsub.f32 %v202, %v208
      %s210 = scalar_lea.vmem %s5, 16
      %211 = vst [vmem:[%s210] sm:$0xff] %v209
      %v212 = vmul.f32 %v186, %v206
      %v213 = vmul.f32 %v190, %v200
      %v214 = vadd.f32 %v212, %v213
      %s215 = scalar_lea.vmem %s5, 24
      %216 = vst [vmem:[%s215] sm:$0xff] %v214
    $region33: #{_forward_impl.1} parent=1 // pred_fallthru
      _
    // Predicated region
    $region34: #{_forward_impl.1} parent=1 // pred_check
      _
    $region35: #{_forward_impl.1} parent=1 // pred_check_branch
      %218 = sbr.rel (0) target = $region37
    $region36: #{_forward_impl.1} parent=1 // pred_region
      _
    $region37: #{_forward_impl.1} parent=1 // pred_fallthru
      _
    // Predicated region
    $region38: #{_forward_impl.1} parent=1 // pred_check
      _
    $region39: #{_forward_impl.1} parent=1 // pred_check_branch
      %220 = sbr.rel (0) target = $region41
    $region40: #{_forward_impl.1} parent=1 // pred_region
      _
    $region41: #{_forward_impl.1} parent=1 // pred_fallthru
      _
    %221 = vsyncpa [#allocation4], 1

</llo_original>
